<compile_context>
chip_gen: v5e
topology: v5e:2x2
jax: 0.10.0
libtpu: 0.0.40
codegen_flags: <defaults>
</compile_context>

<pallas_src>
import math

import jax
import jax.numpy as jnp
from jax.experimental import pallas as pl
from jax.experimental.pallas import tpu as pltpu


# Tile targets (f32).  Conservative enough for v7x's 64 MiB VMEM, large enough
# to reach a good fraction of HBM roofline on v5e/v6e/v7x.
_TILE_M = 512    # row tile of the left operand / output
_TILE_K = 512    # reduction tile
_TILE_N = 256    # lane tile of the output


def _round_up(x, m):
    return ((x + m - 1) // m) * m


def _dim_and_tile(dim, target):
    """Pad `dim` to a lane-dense (128-multiple) size and pick a dividing tile."""
    d = _round_up(dim, 128)
    if d <= target:
        return d, d                    # single full-size block
    return _round_up(dim, target), target


def _pad2d(x, shape):
    pr = shape[0] - x.shape[0]
    pc = shape[1] - x.shape[1]
    if pr == 0 and pc == 0:
        return x
    return jnp.pad(x, ((0, pr), (0, pc)))


def _mm_kernel(a_ref, b_ref, o_ref, acc_ref):
    """o = a @ b, tiled, f32 VMEM accumulator over the (last) K grid axis."""
    @pl.when(pl.program_id(2) == 0)
    def _():
        acc_ref[...] = jnp.zeros_like(acc_ref)

    acc_ref[...] += jnp.dot(a_ref[...], b_ref[...],
                            preferred_element_type=jnp.float32)

    @pl.when(pl.program_id(2) == pl.num_programs(2) - 1)
    def _():
        o_ref[...] = acc_ref[...].astype(o_ref.dtype)


def _mm_bias_kernel(a_ref, b_ref, bias_ref, o_ref, acc_ref):
    """o = a @ b + bias (bias broadcast over rows), same accumulator scheme."""
    @pl.when(pl.program_id(2) == 0)
    def _():
        acc_ref[...] = jnp.zeros_like(acc_ref)

    acc_ref[...] += jnp.dot(a_ref[...], b_ref[...],
                            preferred_element_type=jnp.float32)

    @pl.when(pl.program_id(2) == pl.num_programs(2) - 1)
    def _():
        o_ref[...] = (acc_ref[...] + bias_ref[...]).astype(o_ref.dtype)


def _pallas_matmul(a, b, bias2d, *, tm, tn, tk, out_dtype):
    """Tiled MXU matmul (optionally fused + bias).  Dims must divide the tiles."""
    m, k = a.shape
    k2, n = b.shape
    assert k == k2 and m % tm == 0 and n % tn == 0 and k % tk == 0

    in_specs = [
        pl.BlockSpec((tm, tk), lambda i, j, kk: (i, kk)),
        pl.BlockSpec((tk, tn), lambda i, j, kk: (kk, j)),
    ]
    operands = [a, b]
    if bias2d is not None:
        in_specs.append(pl.BlockSpec((1, tn), lambda i, j, kk: (0, j)))
        operands.append(bias2d)
        kernel = _mm_bias_kernel
    else:
        kernel = _mm_kernel

    return pl.pallas_call(
        kernel,
        out_shape=jax.ShapeDtypeStruct((m, n), out_dtype),
        grid=(m // tm, n // tn, k // tk),
        in_specs=in_specs,
        out_specs=pl.BlockSpec((tm, tn), lambda i, j, kk: (i, j)),
        scratch_shapes=[pltpu.VMEM((tm, tn), jnp.float32)],
        compiler_params=pltpu.CompilerParams(
            dimension_semantics=("parallel", "parallel", "arbitrary")),
    )(*operands)


@jax.jit
def graph_conv_layer(feature, adj, weight, bias):
    """Pallas GCN layer: adj @ (feature @ weight) + bias."""
    n_nodes, f_in = feature.shape
    f_out = weight.shape[1]

    n_pad, t_node = _dim_and_tile(n_nodes, _TILE_M)    # rows AND adj's K dim
    fin_pad, t_fin = _dim_and_tile(f_in, _TILE_K)
    fout_pad, t_fout = _dim_and_tile(f_out, _TILE_N)

    feat_p = _pad2d(feature, (n_pad, fin_pad))
    adj_p = _pad2d(adj, (n_pad, n_pad))
    w_p = _pad2d(weight, (fin_pad, fout_pad))
    b_p = _pad2d(bias.reshape(1, f_out), (1, fout_pad))

    # support = feature @ W  -- computed once, reused by every adj row tile.
    support = _pallas_matmul(feat_p, w_p, None,
                             tm=t_node, tn=t_fout, tk=t_fin,
                             out_dtype=feature.dtype)
    # output = adj @ support + bias  -- adj streamed tile-by-tile through VMEM.
    out_p = _pallas_matmul(adj_p, support, b_p,
                           tm=t_node, tn=t_fout, tk=t_node,
                           out_dtype=feature.dtype)
    return out_p[:n_nodes, :f_out]


def init_params(key, in_features, out_features, dtype=jnp.float32):
    """Deterministic parameter init mirroring the PyTorch module's __init__."""
    k_w, k_b = jax.random.split(key)
    # xavier_uniform_ on weight [in_features, out_features]
    limit = math.sqrt(6.0 / (in_features + out_features))
    weight = jax.random.uniform(
        k_w, (in_features, out_features), dtype=dtype, minval=-limit, maxval=limit
    )
    # bias ~ U(-1/sqrt(out_features), 1/sqrt(out_features))
    stdv = 1.0 / math.sqrt(out_features)
    bias = jax.random.uniform(
        k_b, (out_features,), dtype=dtype, minval=-stdv, maxval=stdv
    )
    return weight, bias


if __name__ == "__main__":
    key = jax.random.PRNGKey(0)
    (k_feat, k_adj, k_param,
     k2_feat, k2_adj, k2_param) = jax.random.split(key, 6)

    # --- tiny shapes matching the module's toy usage -------------------------
    n_nodes, in_features, out_features = 8, 16, 32
    feature = jax.random.normal(k_feat, (n_nodes, in_features), dtype=jnp.float32)
    adj_raw = jax.random.uniform(k_adj, (n_nodes, n_nodes), dtype=jnp.float32)
    adj = (adj_raw + adj_raw.T) / 2.0
    weight, bias = init_params(k_param, in_features, out_features)

    out = jax.block_until_ready(graph_conv_layer(feature, adj, weight, bias))
    ref = adj @ (feature @ weight) + bias
    assert out.shape == (n_nodes, out_features)
    assert jnp.allclose(out, ref, atol=1e-4, rtol=1e-4), "small-shape mismatch"

    # --- larger shapes that exercise multi-tile pipelining / K accumulation --
    n2, fin2, fout2 = 640, 200, 160          # pads to 1024 / 256 / 256, K grid = 2
    feature2 = jax.random.normal(k2_feat, (n2, fin2), dtype=jnp.float32)
    adj2_raw = jax.random.uniform(k2_adj, (n2, n2), dtype=jnp.float32)
    adj2 = (adj2_raw + adj2_raw.T) / 2.0
    weight2, bias2 = init_params(k2_param, fin2, fout2)

    out2 = jax.block_until_ready(graph_conv_layer(feature2, adj2, weight2, bias2))
    ref2 = adj2 @ (feature2 @ weight2) + bias2
    assert out2.shape == (n2, fout2)
    rel_err = jnp.linalg.norm(out2 - ref2) / jnp.linalg.norm(ref2)
    assert float(rel_err) < 1e-2, f"large-shape mismatch: rel_err={float(rel_err)}"

    print("KERNEL_OK")
</pallas_src>

<mosaic_0001>
module attributes {stable_mosaic.version = 11 : i64} {
  func.func @_mm_kernel(%arg0: i32, %arg1: i32, %arg2: i32, %arg3: memref<128x128xf32, #tpu.memory_space<vmem>>, %arg4: memref<128x128xf32, #tpu.memory_space<vmem>>, %arg5: memref<128x128xf32, #tpu.memory_space<vmem>>, %arg6: memref<128x128xf32, #tpu.memory_space<vmem>>) attributes {dimension_semantics = [#tpu.dimension_semantics<parallel>, #tpu.dimension_semantics<parallel>, #tpu.dimension_semantics<arbitrary>], iteration_bounds = array<i64: 1, 1, 1>, scalar_prefetch = 0 : i64, scratch_operands = 1 : i64, tpu.core_type = #tpu.core_type<tc>, window_params = [{transform_indices = @transform_0, window_bounds = array<i64: 128, 128>}, {transform_indices = @transform_1, window_bounds = array<i64: 128, 128>}, {transform_indices = @transform_2, window_bounds = array<i64: 128, 128>}]} {
    %c0_i32 = arith.constant 0 : i32
    %0 = arith.cmpi eq, %arg2, %c0_i32 : i32
    %1 = arith.extui %0 : i1 to i32
    %c0_i32_0 = arith.constant 0 : i32
    %2 = arith.cmpi ne, %1, %c0_i32_0 : i32
    scf.if %2 {
      %cst_10 = arith.constant 0.000000e+00 : f32
      %12 = vector.broadcast %cst_10 : f32 to vector<128x128xf32>
      %c0_11 = arith.constant 0 : index
      %c0_12 = arith.constant 0 : index
      %13 = vector.load %arg6[%c0_11, %c0_12] : memref<128x128xf32, #tpu.memory_space<vmem>>, vector<128x128xf32>
      tpu.vector_store %arg6[%c0_11, %c0_12], %12 {strides = array<i32>} : memref<128x128xf32, #tpu.memory_space<vmem>>, vector<128x128xf32>,
    } else {
    }
    %c0 = arith.constant 0 : index
    %c0_1 = arith.constant 0 : index
    %3 = vector.load %arg6[%c0, %c0_1] : memref<128x128xf32, #tpu.memory_space<vmem>>, vector<128x128xf32>
    %c0_2 = arith.constant 0 : index
    %c0_3 = arith.constant 0 : index
    %4 = vector.load %arg3[%c0_2, %c0_3] : memref<128x128xf32, #tpu.memory_space<vmem>>, vector<128x128xf32>
    %c0_4 = arith.constant 0 : index
    %c0_5 = arith.constant 0 : index
    %5 = vector.load %arg4[%c0_4, %c0_5] : memref<128x128xf32, #tpu.memory_space<vmem>>, vector<128x128xf32>
    %cst = arith.constant dense<0.000000e+00> : vector<128x128xf32>
    %6 = tpu.matmul %4, %5, %cst {dimension_numbers = #tpu.dot_dimension_numbers<[1], [0], [0], [1], [0, 0, 1, 1], [], []>} : vector<128x128xf32>, vector<128x128xf32>, vector<128x128xf32> -> vector<128x128xf32>
    %7 = arith.addf %3, %6 : vector<128x128xf32>
    %c0_6 = arith.constant 0 : index
    %c0_7 = arith.constant 0 : index
    %8 = vector.load %arg6[%c0_6, %c0_7] : memref<128x128xf32, #tpu.memory_space<vmem>>, vector<128x128xf32>
    tpu.vector_store %arg6[%c0_6, %c0_7], %7 {strides = array<i32>} : memref<128x128xf32, #tpu.memory_space<vmem>>, vector<128x128xf32>,
    %c0_i32_8 = arith.constant 0 : i32
    %9 = arith.cmpi eq, %arg2, %c0_i32_8 : i32
    %10 = arith.extui %9 : i1 to i32
    %c0_i32_9 = arith.constant 0 : i32
    %11 = arith.cmpi ne, %10, %c0_i32_9 : i32
    scf.if %11 {
      %c0_10 = arith.constant 0 : index
      %c0_11 = arith.constant 0 : index
      %12 = vector.load %arg6[%c0_10, %c0_11] : memref<128x128xf32, #tpu.memory_space<vmem>>, vector<128x128xf32>
      %c0_12 = arith.constant 0 : index
      %c0_13 = arith.constant 0 : index
      %13 = vector.load %arg5[%c0_12, %c0_13] : memref<128x128xf32, #tpu.memory_space<vmem>>, vector<128x128xf32>
      tpu.vector_store %arg5[%c0_12, %c0_13], %12 {strides = array<i32>} : memref<128x128xf32, #tpu.memory_space<vmem>>, vector<128x128xf32>,
    } else {
    }
    return
  }
  func.func @transform_0(%arg0: i32, %arg1: i32, %arg2: i32) -> (i32, i32) {
    %c0_i32 = arith.constant 0 : i32
    return %arg0, %arg2 : i32, i32
  }
  func.func @transform_1(%arg0: i32, %arg1: i32, %arg2: i32) -> (i32, i32) {
    %c0_i32 = arith.constant 0 : i32
    return %arg2, %arg1 : i32, i32
  }
  func.func @transform_2(%arg0: i32, %arg1: i32, %arg2: i32) -> (i32, i32) {
    %c0_i32 = arith.constant 0 : i32
    return %arg0, %arg1 : i32, i32
  }
}

module attributes {stable_mosaic.version = 11 : i64} {
  func.func @_mm_bias_kernel(%arg0: i32, %arg1: i32, %arg2: i32, %arg3: memref<128x128xf32, #tpu.memory_space<vmem>>, %arg4: memref<128x128xf32, #tpu.memory_space<vmem>>, %arg5: memref<1x128xf32, #tpu.memory_space<vmem>>, %arg6: memref<128x128xf32, #tpu.memory_space<vmem>>, %arg7: memref<128x128xf32, #tpu.memory_space<vmem>>) attributes {dimension_semantics = [#tpu.dimension_semantics<parallel>, #tpu.dimension_semantics<parallel>, #tpu.dimension_semantics<arbitrary>], iteration_bounds = array<i64: 1, 1, 1>, scalar_prefetch = 0 : i64, scratch_operands = 1 : i64, tpu.core_type = #tpu.core_type<tc>, window_params = [{transform_indices = @transform_0, window_bounds = array<i64: 128, 128>}, {transform_indices = @transform_1, window_bounds = array<i64: 128, 128>}, {transform_indices = @transform_2, window_bounds = array<i64: 1, 128>}, {transform_indices = @transform_3, window_bounds = array<i64: 128, 128>}]} {
    %c0_i32 = arith.constant 0 : i32
    %0 = arith.cmpi eq, %arg2, %c0_i32 : i32
    %1 = arith.extui %0 : i1 to i32
    %c0_i32_0 = arith.constant 0 : i32
    %2 = arith.cmpi ne, %1, %c0_i32_0 : i32
    scf.if %2 {
      %cst_10 = arith.constant 0.000000e+00 : f32
      %12 = vector.broadcast %cst_10 : f32 to vector<128x128xf32>
      %c0_11 = arith.constant 0 : index
      %c0_12 = arith.constant 0 : index
      %13 = vector.load %arg7[%c0_11, %c0_12] : memref<128x128xf32, #tpu.memory_space<vmem>>, vector<128x128xf32>
      tpu.vector_store %arg7[%c0_11, %c0_12], %12 {strides = array<i32>} : memref<128x128xf32, #tpu.memory_space<vmem>>, vector<128x128xf32>,
    } else {
    }
    %c0 = arith.constant 0 : index
    %c0_1 = arith.constant 0 : index
    %3 = vector.load %arg7[%c0, %c0_1] : memref<128x128xf32, #tpu.memory_space<vmem>>, vector<128x128xf32>
    %c0_2 = arith.constant 0 : index
    %c0_3 = arith.constant 0 : index
    %4 = vector.load %arg3[%c0_2, %c0_3] : memref<128x128xf32, #tpu.memory_space<vmem>>, vector<128x128xf32>
    %c0_4 = arith.constant 0 : index
    %c0_5 = arith.constant 0 : index
    %5 = vector.load %arg4[%c0_4, %c0_5] : memref<128x128xf32, #tpu.memory_space<vmem>>, vector<128x128xf32>
    %cst = arith.constant dense<0.000000e+00> : vector<128x128xf32>
    %6 = tpu.matmul %4, %5, %cst {dimension_numbers = #tpu.dot_dimension_numbers<[1], [0], [0], [1], [0, 0, 1, 1], [], []>} : vector<128x128xf32>, vector<128x128xf32>, vector<128x128xf32> -> vector<128x128xf32>
    %7 = arith.addf %3, %6 : vector<128x128xf32>
    %c0_6 = arith.constant 0 : index
    %c0_7 = arith.constant 0 : index
    %8 = vector.load %arg7[%c0_6, %c0_7] : memref<128x128xf32, #tpu.memory_space<vmem>>, vector<128x128xf32>
    tpu.vector_store %arg7[%c0_6, %c0_7], %7 {strides = array<i32>} : memref<128x128xf32, #tpu.memory_space<vmem>>, vector<128x128xf32>,
    %c0_i32_8 = arith.constant 0 : i32
    %9 = arith.cmpi eq, %arg2, %c0_i32_8 : i32
    %10 = arith.extui %9 : i1 to i32
    %c0_i32_9 = arith.constant 0 : i32
    %11 = arith.cmpi ne, %10, %c0_i32_9 : i32
    scf.if %11 {
      %c0_10 = arith.constant 0 : index
      %c0_11 = arith.constant 0 : index
      %12 = vector.load %arg7[%c0_10, %c0_11] : memref<128x128xf32, #tpu.memory_space<vmem>>, vector<128x128xf32>
      %c0_12 = arith.constant 0 : index
      %c0_13 = arith.constant 0 : index
      %13 = vector.load %arg5[%c0_12, %c0_13] : memref<1x128xf32, #tpu.memory_space<vmem>>, vector<1x128xf32>
      %14 = vector.broadcast %13 : vector<1x128xf32> to vector<128x128xf32>
      %15 = arith.addf %12, %14 : vector<128x128xf32>
      %c0_14 = arith.constant 0 : index
      %c0_15 = arith.constant 0 : index
      %16 = vector.load %arg6[%c0_14, %c0_15] : memref<128x128xf32, #tpu.memory_space<vmem>>, vector<128x128xf32>
      tpu.vector_store %arg6[%c0_14, %c0_15], %15 {strides = array<i32>} : memref<128x128xf32, #tpu.memory_space<vmem>>, vector<128x128xf32>,
    } else {
    }
    return
  }
  func.func @transform_0(%arg0: i32, %arg1: i32, %arg2: i32) -> (i32, i32) {
    %c0_i32 = arith.constant 0 : i32
    return %arg0, %arg2 : i32, i32
  }
  func.func @transform_1(%arg0: i32, %arg1: i32, %arg2: i32) -> (i32, i32) {
    %c0_i32 = arith.constant 0 : i32
    return %arg2, %arg1 : i32, i32
  }
  func.func @transform_2(%arg0: i32, %arg1: i32, %arg2: i32) -> (i32, i32) {
    %c0_i32 = arith.constant 0 : i32
    %c0_i32_0 = arith.constant 0 : i32
    return %c0_i32, %arg1 : i32, i32
  }
  func.func @transform_3(%arg0: i32, %arg1: i32, %arg2: i32) -> (i32, i32) {
    %c0_i32 = arith.constant 0 : i32
    return %arg0, %arg1 : i32, i32
  }
}

</mosaic_0001>

<llo_original>
// kernel: graph_conv_layer.2
$region0: #{graph_conv_layer.2}
  #allocation0 [shape = 'u32[]', space=smem, size = 0x4, offset = 0x4, fixed_abs, tag = 'smem constant byte address 0x4 - core index']
  #allocation1 [shape = 'u32[72,128]{1,0:T(1,128)}', space=vmem, size = 0x9000, scoped, tag = 'internal scratch']
  #allocation2 [shape = 'f32[128,128]{1,0:T(8,128)}', space=vmem, size = 0x10000, scoped, tag = 'scratch operand']
  %s0 = inlined_call_operand.vmem [shape: f32[128,128], index: 0, kind: input, shape index: {}]
  %s1 = inlined_call_operand.vmem [shape: f32[128,128], index: 1, kind: input, shape index: {}]
  %s2 = inlined_call_operand.vmem [shape: f32[128,128], index: 2, kind: output, shape index: {}]
  %s3 = sld [smem:[#allocation0]]
  $region26: #{graph_conv_layer.2} parent=0
    _
  %s5 = ssub.s32 1, %s3
  %s6 = scalar_select 0, %s5, %s3
  // Predicated region
  $region2: #{graph_conv_layer.2} parent=0 // pred_check
    _
  $region3: #{graph_conv_layer.2} parent=0 // pred_check_branch
    %8 = sbr.rel (0) target = $region5
  $region4: #{graph_conv_layer.2} parent=0 // pred_region
    _
  $region5: #{graph_conv_layer.2} parent=0 // pred_fallthru
    _
  // Predicated region
  $region6: #{graph_conv_layer.2} parent=0 // pred_check
    _
  $region7: #{graph_conv_layer.2} parent=0 // pred_check_branch
    %10 = sbr.rel (0) target = $region9
  $region8: #{graph_conv_layer.2} parent=0 // pred_region
    _
  $region9: #{graph_conv_layer.2} parent=0 // pred_fallthru
    _
  %p11 = scmp.eq.s32.totalorder 0, 0
  // Predicated region
  $region10: #{graph_conv_layer.2} parent=0 // pred_check
    %p12 = pneg %p11
  $region11: #{graph_conv_layer.2} parent=0 // pred_check_branch
    %14 = sbr.rel (%p12) target = $region13
  $region12: #{graph_conv_layer.2} parent=0 // pred_region
    %15 = vst [vmem:[#allocation2] sm:$0xff] 0.0
    %16 = vst [vmem:[#allocation2 + $0x8] sm:$0xff] 0.0
    %17 = vst [vmem:[#allocation2 + $0x10] sm:$0xff] 0.0
    %18 = vst [vmem:[#allocation2 + $0x18] sm:$0xff] 0.0
    %19 = vst [vmem:[#allocation2 + $0x20] sm:$0xff] 0.0
    %20 = vst [vmem:[#allocation2 + $0x28] sm:$0xff] 0.0
    %21 = vst [vmem:[#allocation2 + $0x30] sm:$0xff] 0.0
    %22 = vst [vmem:[#allocation2 + $0x38] sm:$0xff] 0.0
    %23 = vst [vmem:[#allocation2 + $0x40] sm:$0xff] 0.0
    %24 = vst [vmem:[#allocation2 + $0x48] sm:$0xff] 0.0
    %25 = vst [vmem:[#allocation2 + $0x50] sm:$0xff] 0.0
    %26 = vst [vmem:[#allocation2 + $0x58] sm:$0xff] 0.0
    %27 = vst [vmem:[#allocation2 + $0x60] sm:$0xff] 0.0
    %28 = vst [vmem:[#allocation2 + $0x68] sm:$0xff] 0.0
    %29 = vst [vmem:[#allocation2 + $0x70] sm:$0xff] 0.0
    %30 = vst [vmem:[#allocation2 + $0x78] sm:$0xff] 0.0
  $region13: #{graph_conv_layer.2} parent=0 // pred_fallthru
    _
  %v31 = vld [vmem:[#allocation2] sm:$0xff]
  %v32 = vld [vmem:[#allocation2 + $0x8] sm:$0xff]
  %v33 = vld [vmem:[#allocation2 + $0x10] sm:$0xff]
  %v34 = vld [vmem:[#allocation2 + $0x18] sm:$0xff]
  %v35 = vld [vmem:[#allocation2 + $0x20] sm:$0xff]
  %v36 = vld [vmem:[#allocation2 + $0x28] sm:$0xff]
  %v37 = vld [vmem:[#allocation2 + $0x30] sm:$0xff]
  %v38 = vld [vmem:[#allocation2 + $0x38] sm:$0xff]
  %v39 = vld [vmem:[#allocation2 + $0x40] sm:$0xff]
  %v40 = vld [vmem:[#allocation2 + $0x48] sm:$0xff]
  %v41 = vld [vmem:[#allocation2 + $0x50] sm:$0xff]
  %v42 = vld [vmem:[#allocation2 + $0x58] sm:$0xff]
  %v43 = vld [vmem:[#allocation2 + $0x60] sm:$0xff]
  %v44 = vld [vmem:[#allocation2 + $0x68] sm:$0xff]
  %v45 = vld [vmem:[#allocation2 + $0x70] sm:$0xff]
  %v46 = vld [vmem:[#allocation2 + $0x78] sm:$0xff]
  %v47 = vld [vmem:[%s0] sm:$0xff]
  %v48 = vld [vmem:[%s0 + $0x8] sm:$0xff]
  %v49 = vld [vmem:[%s0 + $0x10] sm:$0xff]
  %v50 = vld [vmem:[%s0 + $0x18] sm:$0xff]
  %v51 = vld [vmem:[%s0 + $0x20] sm:$0xff]
  %v52 = vld [vmem:[%s0 + $0x28] sm:$0xff]
  %v53 = vld [vmem:[%s0 + $0x30] sm:$0xff]
  %v54 = vld [vmem:[%s0 + $0x38] sm:$0xff]
  %v55 = vld [vmem:[%s0 + $0x40] sm:$0xff]
  %v56 = vld [vmem:[%s0 + $0x48] sm:$0xff]
  %v57 = vld [vmem:[%s0 + $0x50] sm:$0xff]
  %v58 = vld [vmem:[%s0 + $0x58] sm:$0xff]
  %v59 = vld [vmem:[%s0 + $0x60] sm:$0xff]
  %v60 = vld [vmem:[%s0 + $0x68] sm:$0xff]
  %v61 = vld [vmem:[%s0 + $0x70] sm:$0xff]
  %v62 = vld [vmem:[%s0 + $0x78] sm:$0xff]
  %v63 = vld [vmem:[%s1] sm:$0xff]
  %v64 = vld [vmem:[%s1 + $0x8] sm:$0xff]
  %v65 = vld [vmem:[%s1 + $0x10] sm:$0xff]
  %v66 = vld [vmem:[%s1 + $0x18] sm:$0xff]
  %v67 = vld [vmem:[%s1 + $0x20] sm:$0xff]
  %v68 = vld [vmem:[%s1 + $0x28] sm:$0xff]
  %v69 = vld [vmem:[%s1 + $0x30] sm:$0xff]
  %v70 = vld [vmem:[%s1 + $0x38] sm:$0xff]
  %v71 = vld [vmem:[%s1 + $0x40] sm:$0xff]
  %v72 = vld [vmem:[%s1 + $0x48] sm:$0xff]
  %v73 = vld [vmem:[%s1 + $0x50] sm:$0xff]
  %v74 = vld [vmem:[%s1 + $0x58] sm:$0xff]
  %v75 = vld [vmem:[%s1 + $0x60] sm:$0xff]
  %v76 = vld [vmem:[%s1 + $0x68] sm:$0xff]
  %v77 = vld [vmem:[%s1 + $0x70] sm:$0xff]
  %v78 = vld [vmem:[%s1 + $0x78] sm:$0xff]
  %79 = vmatpush.msra.mxu0 %v78
  %80 = vmatpush.msra.mxu0 %v77
  %81 = vmatpush.msra.mxu0 %v76
  %82 = vmatpush.msra.mxu0 %v75
  %83 = vmatpush.msra.mxu0 %v74
  %84 = vmatpush.msra.mxu0 %v73
  %85 = vmatpush.msra.mxu0 %v72
  %86 = vmatpush.msra.mxu0 %v71
  %87 = vmatpush.msra.mxu0 %v70
  %88 = vmatpush.msra.mxu0 %v69
  %89 = vmatpush.msra.mxu0 %v68
  %90 = vmatpush.msra.mxu0 %v67
  %91 = vmatpush.msra.mxu0 %v66
  %92 = vmatpush.msra.mxu0 %v65
  %93 = vmatpush.msra.mxu0 %v64
  %94 = vmatpush.msra.mxu0 %v63
  %95 = vmatmul.f32.gmra.mxu0 %v47
  %v96 = vpop.f32.mrf.mxu0
  %v97 = vadd.f32 0.0, %v96
  %98 = vmatmul.f32.gmra.mxu0 %v48
  %v99 = vpop.f32.mrf.mxu0
  %v100 = vadd.f32 0.0, %v99
  %101 = vmatmul.f32.gmra.mxu0 %v49
  %v102 = vpop.f32.mrf.mxu0
  %v103 = vadd.f32 0.0, %v102
  %104 = vmatmul.f32.gmra.mxu0 %v50
  %v105 = vpop.f32.mrf.mxu0
  %v106 = vadd.f32 0.0, %v105
  %107 = vmatmul.f32.gmra.mxu0 %v51
  %v108 = vpop.f32.mrf.mxu0
  %v109 = vadd.f32 0.0, %v108
  %110 = vmatmul.f32.gmra.mxu0 %v52
  %v111 = vpop.f32.mrf.mxu0
  %v112 = vadd.f32 0.0, %v111
  %113 = vmatmul.f32.gmra.mxu0 %v53
  %v114 = vpop.f32.mrf.mxu0
  %v115 = vadd.f32 0.0, %v114
  %116 = vmatmul.f32.gmra.mxu0 %v54
  %v117 = vpop.f32.mrf.mxu0
  %v118 = vadd.f32 0.0, %v117
  %119 = vmatmul.f32.gmra.mxu0 %v55
  %v120 = vpop.f32.mrf.mxu0
  %v121 = vadd.f32 0.0, %v120
  %122 = vmatmul.f32.gmra.mxu0 %v56
  %v123 = vpop.f32.mrf.mxu0
  %v124 = vadd.f32 0.0, %v123
  %125 = vmatmul.f32.gmra.mxu0 %v57
  %v126 = vpop.f32.mrf.mxu0
  %v127 = vadd.f32 0.0, %v126
  %128 = vmatmul.f32.gmra.mxu0 %v58
  %v129 = vpop.f32.mrf.mxu0
  %v130 = vadd.f32 0.0, %v129
  %131 = vmatmul.f32.gmra.mxu0 %v59
  %v132 = vpop.f32.mrf.mxu0
  %v133 = vadd.f32 0.0, %v132
  %134 = vmatmul.f32.gmra.mxu0 %v60
  %v135 = vpop.f32.mrf.mxu0
  %v136 = vadd.f32 0.0, %v135
  %137 = vmatmul.f32.gmra.mxu0 %v61
  %v138 = vpop.f32.mrf.mxu0
  %v139 = vadd.f32 0.0, %v138
  %140 = vmatmul.f32.gmra.mxu0 %v62
  %v141 = vpop.f32.mrf.mxu0
  %v142 = vadd.f32 0.0, %v141
  %143 = vdwg.mxu0
  %v144 = vadd.f32 %v31, %v97
  %v145 = vadd.f32 %v32, %v100
  %v146 = vadd.f32 %v33, %v103
  %v147 = vadd.f32 %v34, %v106
  %v148 = vadd.f32 %v35, %v109
  %v149 = vadd.f32 %v36, %v112
  %v150 = vadd.f32 %v37, %v115
  %v151 = vadd.f32 %v38, %v118
  %v152 = vadd.f32 %v39, %v121
  %v153 = vadd.f32 %v40, %v124
  %v154 = vadd.f32 %v41, %v127
  %v155 = vadd.f32 %v42, %v130
  %v156 = vadd.f32 %v43, %v133
  %v157 = vadd.f32 %v44, %v136
  %v158 = vadd.f32 %v45, %v139
  %v159 = vadd.f32 %v46, %v142
  %160 = vst [vmem:[#allocation2] sm:$0xff] %v144
  %161 = vst [vmem:[#allocation2 + $0x8] sm:$0xff] %v145
  %162 = vst [vmem:[#allocation2 + $0x10] sm:$0xff] %v146
  %163 = vst [vmem:[#allocation2 + $0x18] sm:$0xff] %v147
  %164 = vst [vmem:[#allocation2 + $0x20] sm:$0xff] %v148
  %165 = vst [vmem:[#allocation2 + $0x28] sm:$0xff] %v149
  %166 = vst [vmem:[#allocation2 + $0x30] sm:$0xff] %v150
  %167 = vst [vmem:[#allocation2 + $0x38] sm:$0xff] %v151
  %168 = vst [vmem:[#allocation2 + $0x40] sm:$0xff] %v152
  %169 = vst [vmem:[#allocation2 + $0x48] sm:$0xff] %v153
  %170 = vst [vmem:[#allocation2 + $0x50] sm:$0xff] %v154
  %171 = vst [vmem:[#allocation2 + $0x58] sm:$0xff] %v155
  %172 = vst [vmem:[#allocation2 + $0x60] sm:$0xff] %v156
  %173 = vst [vmem:[#allocation2 + $0x68] sm:$0xff] %v157
  %174 = vst [vmem:[#allocation2 + $0x70] sm:$0xff] %v158
  %175 = vst [vmem:[#allocation2 + $0x78] sm:$0xff] %v159
  // Predicated region
  $region14: #{graph_conv_layer.2} parent=0 // pred_check
    %p176 = pneg %p11
  $region15: #{graph_conv_layer.2} parent=0 // pred_check_branch
    %178 = sbr.rel (%p176) target = $region17
  $region16: #{graph_conv_layer.2} parent=0 // pred_region
    %v179 = vld [vmem:[#allocation2] sm:$0xff]
    %v180 = vld [vmem:[#allocation2 + $0x8] sm:$0xff]
    %v181 = vld [vmem:[#allocation2 + $0x10] sm:$0xff]
    %v182 = vld [vmem:[#allocation2 + $0x18] sm:$0xff]
    %v183 = vld [vmem:[#allocation2 + $0x20] sm:$0xff]
    %v184 = vld [vmem:[#allocation2 + $0x28] sm:$0xff]
    %v185 = vld [vmem:[#allocation2 + $0x30] sm:$0xff]
    %v186 = vld [vmem:[#allocation2 + $0x38] sm:$0xff]
    %v187 = vld [vmem:[#allocation2 + $0x40] sm:$0xff]
    %v188 = vld [vmem:[#allocation2 + $0x48] sm:$0xff]
    %v189 = vld [vmem:[#allocation2 + $0x50] sm:$0xff]
    %v190 = vld [vmem:[#allocation2 + $0x58] sm:$0xff]
    %v191 = vld [vmem:[#allocation2 + $0x60] sm:$0xff]
    %v192 = vld [vmem:[#allocation2 + $0x68] sm:$0xff]
    %v193 = vld [vmem:[#allocation2 + $0x70] sm:$0xff]
    %v194 = vld [vmem:[#allocation2 + $0x78] sm:$0xff]
    %195 = vst [vmem:[%s2] sm:$0xff] %v179
    %196 = vst [vmem:[%s2 + $0x8] sm:$0xff] %v180
    %197 = vst [vmem:[%s2 + $0x10] sm:$0xff] %v181
    %198 = vst [vmem:[%s2 + $0x18] sm:$0xff] %v182
    %199 = vst [vmem:[%s2 + $0x20] sm:$0xff] %v183
    %200 = vst [vmem:[%s2 + $0x28] sm:$0xff] %v184
    %201 = vst [vmem:[%s2 + $0x30] sm:$0xff] %v185
    %202 = vst [vmem:[%s2 + $0x38] sm:$0xff] %v186
    %203 = vst [vmem:[%s2 + $0x40] sm:$0xff] %v187
    %204 = vst [vmem:[%s2 + $0x48] sm:$0xff] %v188
    %205 = vst [vmem:[%s2 + $0x50] sm:$0xff] %v189
    %206 = vst [vmem:[%s2 + $0x58] sm:$0xff] %v190
    %207 = vst [vmem:[%s2 + $0x60] sm:$0xff] %v191
    %208 = vst [vmem:[%s2 + $0x68] sm:$0xff] %v192
    %209 = vst [vmem:[%s2 + $0x70] sm:$0xff] %v193
    %210 = vst [vmem:[%s2 + $0x78] sm:$0xff] %v194
  $region17: #{graph_conv_layer.2} parent=0 // pred_fallthru
    _
  // Predicated region
  $region18: #{graph_conv_layer.2} parent=0 // pred_check
    _
  $region19: #{graph_conv_layer.2} parent=0 // pred_check_branch
    %212 = sbr.rel (0) target = $region21
  $region20: #{graph_conv_layer.2} parent=0 // pred_region
    _
  $region21: #{graph_conv_layer.2} parent=0 // pred_fallthru
    _
  // Predicated region
  $region22: #{graph_conv_layer.2} parent=0 // pred_check
    _
  $region23: #{graph_conv_layer.2} parent=0 // pred_check_branch
    %214 = sbr.rel (0) target = $region25
  $region24: #{graph_conv_layer.2} parent=0 // pred_region
    _
  $region25: #{graph_conv_layer.2} parent=0 // pred_fallthru
    _

// kernel: graph_conv_layer.3
$region0: #{graph_conv_layer.3}
  #allocation0 [shape = 'u32[]', space=smem, size = 0x4, offset = 0x4, fixed_abs, tag = 'smem constant byte address 0x4 - core index']
  #allocation1 [shape = 'u32[72,128]{1,0:T(1,128)}', space=vmem, size = 0x9000, scoped, tag = 'internal scratch']
  #allocation2 [shape = 'f32[128,128]{1,0:T(8,128)}', space=vmem, size = 0x10000, scoped, tag = 'scratch operand']
  %s0 = inlined_call_operand.vmem [shape: f32[128,128], index: 0, kind: input, shape index: {}]
  %s1 = inlined_call_operand.vmem [shape: f32[128,128], index: 1, kind: input, shape index: {}]
  %s2 = inlined_call_operand.vmem [shape: f32[1,128], index: 2, kind: input, shape index: {}]
  %s3 = inlined_call_operand.vmem [shape: f32[128,128], index: 3, kind: output, shape index: {}]
  %s4 = sld [smem:[#allocation0]]
  $region30: #{graph_conv_layer.3} parent=0
    _
  %s6 = ssub.s32 1, %s4
  %s7 = scalar_select 0, %s6, %s4
  // Predicated region
  $region2: #{graph_conv_layer.3} parent=0 // pred_check
    _
  $region3: #{graph_conv_layer.3} parent=0 // pred_check_branch
    %9 = sbr.rel (0) target = $region5
  $region4: #{graph_conv_layer.3} parent=0 // pred_region
    _
  $region5: #{graph_conv_layer.3} parent=0 // pred_fallthru
    _
  // Predicated region
  $region6: #{graph_conv_layer.3} parent=0 // pred_check
    _
  $region7: #{graph_conv_layer.3} parent=0 // pred_check_branch
    %11 = sbr.rel (0) target = $region9
  $region8: #{graph_conv_layer.3} parent=0 // pred_region
    _
  $region9: #{graph_conv_layer.3} parent=0 // pred_fallthru
    _
  // Predicated region
  $region10: #{graph_conv_layer.3} parent=0 // pred_check
    _
  $region11: #{graph_conv_layer.3} parent=0 // pred_check_branch
    %13 = sbr.rel (0) target = $region13
  $region12: #{graph_conv_layer.3} parent=0 // pred_region
    _
  $region13: #{graph_conv_layer.3} parent=0 // pred_fallthru
    _
  %p14 = scmp.eq.s32.totalorder 0, 0
  // Predicated region
  $region14: #{graph_conv_layer.3} parent=0 // pred_check
    %p15 = pneg %p14
  $region15: #{graph_conv_layer.3} parent=0 // pred_check_branch
    %17 = sbr.rel (%p15) target = $region17
  $region16: #{graph_conv_layer.3} parent=0 // pred_region
    %18 = vst [vmem:[#allocation2] sm:$0xff] 0.0
    %19 = vst [vmem:[#allocation2 + $0x8] sm:$0xff] 0.0
    %20 = vst [vmem:[#allocation2 + $0x10] sm:$0xff] 0.0
    %21 = vst [vmem:[#allocation2 + $0x18] sm:$0xff] 0.0
    %22 = vst [vmem:[#allocation2 + $0x20] sm:$0xff] 0.0
    %23 = vst [vmem:[#allocation2 + $0x28] sm:$0xff] 0.0
    %24 = vst [vmem:[#allocation2 + $0x30] sm:$0xff] 0.0
    %25 = vst [vmem:[#allocation2 + $0x38] sm:$0xff] 0.0
    %26 = vst [vmem:[#allocation2 + $0x40] sm:$0xff] 0.0
    %27 = vst [vmem:[#allocation2 + $0x48] sm:$0xff] 0.0
    %28 = vst [vmem:[#allocation2 + $0x50] sm:$0xff] 0.0
    %29 = vst [vmem:[#allocation2 + $0x58] sm:$0xff] 0.0
    %30 = vst [vmem:[#allocation2 + $0x60] sm:$0xff] 0.0
    %31 = vst [vmem:[#allocation2 + $0x68] sm:$0xff] 0.0
    %32 = vst [vmem:[#allocation2 + $0x70] sm:$0xff] 0.0
    %33 = vst [vmem:[#allocation2 + $0x78] sm:$0xff] 0.0
  $region17: #{graph_conv_layer.3} parent=0 // pred_fallthru
    _
  %v34 = vld [vmem:[#allocation2] sm:$0xff]
  %v35 = vld [vmem:[#allocation2 + $0x8] sm:$0xff]
  %v36 = vld [vmem:[#allocation2 + $0x10] sm:$0xff]
  %v37 = vld [vmem:[#allocation2 + $0x18] sm:$0xff]
  %v38 = vld [vmem:[#allocation2 + $0x20] sm:$0xff]
  %v39 = vld [vmem:[#allocation2 + $0x28] sm:$0xff]
  %v40 = vld [vmem:[#allocation2 + $0x30] sm:$0xff]
  %v41 = vld [vmem:[#allocation2 + $0x38] sm:$0xff]
  %v42 = vld [vmem:[#allocation2 + $0x40] sm:$0xff]
  %v43 = vld [vmem:[#allocation2 + $0x48] sm:$0xff]
  %v44 = vld [vmem:[#allocation2 + $0x50] sm:$0xff]
  %v45 = vld [vmem:[#allocation2 + $0x58] sm:$0xff]
  %v46 = vld [vmem:[#allocation2 + $0x60] sm:$0xff]
  %v47 = vld [vmem:[#allocation2 + $0x68] sm:$0xff]
  %v48 = vld [vmem:[#allocation2 + $0x70] sm:$0xff]
  %v49 = vld [vmem:[#allocation2 + $0x78] sm:$0xff]
  %v50 = vld [vmem:[%s0] sm:$0xff]
  %v51 = vld [vmem:[%s0 + $0x8] sm:$0xff]
  %v52 = vld [vmem:[%s0 + $0x10] sm:$0xff]
  %v53 = vld [vmem:[%s0 + $0x18] sm:$0xff]
  %v54 = vld [vmem:[%s0 + $0x20] sm:$0xff]
  %v55 = vld [vmem:[%s0 + $0x28] sm:$0xff]
  %v56 = vld [vmem:[%s0 + $0x30] sm:$0xff]
  %v57 = vld [vmem:[%s0 + $0x38] sm:$0xff]
  %v58 = vld [vmem:[%s0 + $0x40] sm:$0xff]
  %v59 = vld [vmem:[%s0 + $0x48] sm:$0xff]
  %v60 = vld [vmem:[%s0 + $0x50] sm:$0xff]
  %v61 = vld [vmem:[%s0 + $0x58] sm:$0xff]
  %v62 = vld [vmem:[%s0 + $0x60] sm:$0xff]
  %v63 = vld [vmem:[%s0 + $0x68] sm:$0xff]
  %v64 = vld [vmem:[%s0 + $0x70] sm:$0xff]
  %v65 = vld [vmem:[%s0 + $0x78] sm:$0xff]
  %v66 = vld [vmem:[%s1] sm:$0xff]
  %v67 = vld [vmem:[%s1 + $0x8] sm:$0xff]
  %v68 = vld [vmem:[%s1 + $0x10] sm:$0xff]
  %v69 = vld [vmem:[%s1 + $0x18] sm:$0xff]
  %v70 = vld [vmem:[%s1 + $0x20] sm:$0xff]
  %v71 = vld [vmem:[%s1 + $0x28] sm:$0xff]
  %v72 = vld [vmem:[%s1 + $0x30] sm:$0xff]
  %v73 = vld [vmem:[%s1 + $0x38] sm:$0xff]
  %v74 = vld [vmem:[%s1 + $0x40] sm:$0xff]
  %v75 = vld [vmem:[%s1 + $0x48] sm:$0xff]
  %v76 = vld [vmem:[%s1 + $0x50] sm:$0xff]
  %v77 = vld [vmem:[%s1 + $0x58] sm:$0xff]
  %v78 = vld [vmem:[%s1 + $0x60] sm:$0xff]
  %v79 = vld [vmem:[%s1 + $0x68] sm:$0xff]
  %v80 = vld [vmem:[%s1 + $0x70] sm:$0xff]
  %v81 = vld [vmem:[%s1 + $0x78] sm:$0xff]
  %82 = vmatpush.msra.mxu0 %v81
  %83 = vmatpush.msra.mxu0 %v80
  %84 = vmatpush.msra.mxu0 %v79
  %85 = vmatpush.msra.mxu0 %v78
  %86 = vmatpush.msra.mxu0 %v77
  %87 = vmatpush.msra.mxu0 %v76
  %88 = vmatpush.msra.mxu0 %v75
  %89 = vmatpush.msra.mxu0 %v74
  %90 = vmatpush.msra.mxu0 %v73
  %91 = vmatpush.msra.mxu0 %v72
  %92 = vmatpush.msra.mxu0 %v71
  %93 = vmatpush.msra.mxu0 %v70
  %94 = vmatpush.msra.mxu0 %v69
  %95 = vmatpush.msra.mxu0 %v68
  %96 = vmatpush.msra.mxu0 %v67
  %97 = vmatpush.msra.mxu0 %v66
  %98 = vmatmul.f32.gmra.mxu0 %v50
  %v99 = vpop.f32.mrf.mxu0
  %v100 = vadd.f32 0.0, %v99
  %101 = vmatmul.f32.gmra.mxu0 %v51
  %v102 = vpop.f32.mrf.mxu0
  %v103 = vadd.f32 0.0, %v102
  %104 = vmatmul.f32.gmra.mxu0 %v52
  %v105 = vpop.f32.mrf.mxu0
  %v106 = vadd.f32 0.0, %v105
  %107 = vmatmul.f32.gmra.mxu0 %v53
  %v108 = vpop.f32.mrf.mxu0
  %v109 = vadd.f32 0.0, %v108
  %110 = vmatmul.f32.gmra.mxu0 %v54
  %v111 = vpop.f32.mrf.mxu0
  %v112 = vadd.f32 0.0, %v111
  %113 = vmatmul.f32.gmra.mxu0 %v55
  %v114 = vpop.f32.mrf.mxu0
  %v115 = vadd.f32 0.0, %v114
  %116 = vmatmul.f32.gmra.mxu0 %v56
  %v117 = vpop.f32.mrf.mxu0
  %v118 = vadd.f32 0.0, %v117
  %119 = vmatmul.f32.gmra.mxu0 %v57
  %v120 = vpop.f32.mrf.mxu0
  %v121 = vadd.f32 0.0, %v120
  %122 = vmatmul.f32.gmra.mxu0 %v58
  %v123 = vpop.f32.mrf.mxu0
  %v124 = vadd.f32 0.0, %v123
  %125 = vmatmul.f32.gmra.mxu0 %v59
  %v126 = vpop.f32.mrf.mxu0
  %v127 = vadd.f32 0.0, %v126
  %128 = vmatmul.f32.gmra.mxu0 %v60
  %v129 = vpop.f32.mrf.mxu0
  %v130 = vadd.f32 0.0, %v129
  %131 = vmatmul.f32.gmra.mxu0 %v61
  %v132 = vpop.f32.mrf.mxu0
  %v133 = vadd.f32 0.0, %v132
  %134 = vmatmul.f32.gmra.mxu0 %v62
  %v135 = vpop.f32.mrf.mxu0
  %v136 = vadd.f32 0.0, %v135
  %137 = vmatmul.f32.gmra.mxu0 %v63
  %v138 = vpop.f32.mrf.mxu0
  %v139 = vadd.f32 0.0, %v138
  %140 = vmatmul.f32.gmra.mxu0 %v64
  %v141 = vpop.f32.mrf.mxu0
  %v142 = vadd.f32 0.0, %v141
  %143 = vmatmul.f32.gmra.mxu0 %v65
  %v144 = vpop.f32.mrf.mxu0
  %v145 = vadd.f32 0.0, %v144
  %146 = vdwg.mxu0
  %v147 = vadd.f32 %v34, %v100
  %v148 = vadd.f32 %v35, %v103
  %v149 = vadd.f32 %v36, %v106
  %v150 = vadd.f32 %v37, %v109
  %v151 = vadd.f32 %v38, %v112
  %v152 = vadd.f32 %v39, %v115
  %v153 = vadd.f32 %v40, %v118
  %v154 = vadd.f32 %v41, %v121
  %v155 = vadd.f32 %v42, %v124
  %v156 = vadd.f32 %v43, %v127
  %v157 = vadd.f32 %v44, %v130
  %v158 = vadd.f32 %v45, %v133
  %v159 = vadd.f32 %v46, %v136
  %v160 = vadd.f32 %v47, %v139
  %v161 = vadd.f32 %v48, %v142
  %v162 = vadd.f32 %v49, %v145
  %163 = vst [vmem:[#allocation2] sm:$0xff] %v147
  %164 = vst [vmem:[#allocation2 + $0x8] sm:$0xff] %v148
  %165 = vst [vmem:[#allocation2 + $0x10] sm:$0xff] %v149
  %166 = vst [vmem:[#allocation2 + $0x18] sm:$0xff] %v150
  %167 = vst [vmem:[#allocation2 + $0x20] sm:$0xff] %v151
  %168 = vst [vmem:[#allocation2 + $0x28] sm:$0xff] %v152
  %169 = vst [vmem:[#allocation2 + $0x30] sm:$0xff] %v153
  %170 = vst [vmem:[#allocation2 + $0x38] sm:$0xff] %v154
  %171 = vst [vmem:[#allocation2 + $0x40] sm:$0xff] %v155
  %172 = vst [vmem:[#allocation2 + $0x48] sm:$0xff] %v156
  %173 = vst [vmem:[#allocation2 + $0x50] sm:$0xff] %v157
  %174 = vst [vmem:[#allocation2 + $0x58] sm:$0xff] %v158
  %175 = vst [vmem:[#allocation2 + $0x60] sm:$0xff] %v159
  %176 = vst [vmem:[#allocation2 + $0x68] sm:$0xff] %v160
  %177 = vst [vmem:[#allocation2 + $0x70] sm:$0xff] %v161
  %178 = vst [vmem:[#allocation2 + $0x78] sm:$0xff] %v162
  // Predicated region
  $region18: #{graph_conv_layer.3} parent=0 // pred_check
    %p179 = pneg %p14
  $region19: #{graph_conv_layer.3} parent=0 // pred_check_branch
    %181 = sbr.rel (%p179) target = $region21
  $region20: #{graph_conv_layer.3} parent=0 // pred_region
    %v182 = vld [vmem:[#allocation2] sm:$0xff]
    %v183 = vld [vmem:[#allocation2 + $0x8] sm:$0xff]
    %v184 = vld [vmem:[#allocation2 + $0x10] sm:$0xff]
    %v185 = vld [vmem:[#allocation2 + $0x18] sm:$0xff]
    %v186 = vld [vmem:[#allocation2 + $0x20] sm:$0xff]
    %v187 = vld [vmem:[#allocation2 + $0x28] sm:$0xff]
    %v188 = vld [vmem:[#allocation2 + $0x30] sm:$0xff]
    %v189 = vld [vmem:[#allocation2 + $0x38] sm:$0xff]
    %v190 = vld [vmem:[#allocation2 + $0x40] sm:$0xff]
    %v191 = vld [vmem:[#allocation2 + $0x48] sm:$0xff]
    %v192 = vld [vmem:[#allocation2 + $0x50] sm:$0xff]
    %v193 = vld [vmem:[#allocation2 + $0x58] sm:$0xff]
    %v194 = vld [vmem:[#allocation2 + $0x60] sm:$0xff]
    %v195 = vld [vmem:[#allocation2 + $0x68] sm:$0xff]
    %v196 = vld [vmem:[#allocation2 + $0x70] sm:$0xff]
    %v197 = vld [vmem:[#allocation2 + $0x78] sm:$0xff]
    %v198 = vld [vmem:[%s2] sm:$0x1]
    %v200 = vperm.slane %v198, 0
    %v202 = vadd.f32 %v182, %v200
    %v203 = vadd.f32 %v183, %v200
    %v204 = vadd.f32 %v184, %v200
    %v205 = vadd.f32 %v185, %v200
    %v206 = vadd.f32 %v186, %v200
    %v207 = vadd.f32 %v187, %v200
    %v208 = vadd.f32 %v188, %v200
    %v209 = vadd.f32 %v189, %v200
    %v210 = vadd.f32 %v190, %v200
    %v211 = vadd.f32 %v191, %v200
    %v212 = vadd.f32 %v192, %v200
    %v213 = vadd.f32 %v193, %v200
    %v214 = vadd.f32 %v194, %v200
    %v215 = vadd.f32 %v195, %v200
    %v216 = vadd.f32 %v196, %v200
    %v217 = vadd.f32 %v197, %v200
    %218 = vst [vmem:[%s3] sm:$0xff] %v202
    %219 = vst [vmem:[%s3 + $0x8] sm:$0xff] %v203
    %220 = vst [vmem:[%s3 + $0x10] sm:$0xff] %v204
    %221 = vst [vmem:[%s3 + $0x18] sm:$0xff] %v205
    %222 = vst [vmem:[%s3 + $0x20] sm:$0xff] %v206
    %223 = vst [vmem:[%s3 + $0x28] sm:$0xff] %v207
    %224 = vst [vmem:[%s3 + $0x30] sm:$0xff] %v208
    %225 = vst [vmem:[%s3 + $0x38] sm:$0xff] %v209
    %226 = vst [vmem:[%s3 + $0x40] sm:$0xff] %v210
    %227 = vst [vmem:[%s3 + $0x48] sm:$0xff] %v211
    %228 = vst [vmem:[%s3 + $0x50] sm:$0xff] %v212
    %229 = vst [vmem:[%s3 + $0x58] sm:$0xff] %v213
    %230 = vst [vmem:[%s3 + $0x60] sm:$0xff] %v214
    %231 = vst [vmem:[%s3 + $0x68] sm:$0xff] %v215
    %232 = vst [vmem:[%s3 + $0x70] sm:$0xff] %v216
    %233 = vst [vmem:[%s3 + $0x78] sm:$0xff] %v217
  $region21: #{graph_conv_layer.3} parent=0 // pred_fallthru
    _
  // Predicated region
  $region22: #{graph_conv_layer.3} parent=0 // pred_check
    _
  $region23: #{graph_conv_layer.3} parent=0 // pred_check_branch
    %235 = sbr.rel (0) target = $region25
  $region24: #{graph_conv_layer.3} parent=0 // pred_region
    _
  $region25: #{graph_conv_layer.3} parent=0 // pred_fallthru
    _
  // Predicated region
  $region26: #{graph_conv_layer.3} parent=0 // pred_check
    _
  $region27: #{graph_conv_layer.3} parent=0 // pred_check_branch
    %237 = sbr.rel (0) target = $region29
  $region28: #{graph_conv_layer.3} parent=0 // pred_region
    _
  $region29: #{graph_conv_layer.3} parent=0 // pred_fallthru
    _

</llo_original>
